<compile_context>
chip_gen: v5e
topology: v5e:2x2
jax: 0.10.0
libtpu: 0.0.40
codegen_flags: <defaults>
</compile_context>

<pallas_src>
import functools

import jax
import jax.numpy as jnp
import numpy as np
from jax.experimental import pallas as pl
from jax.experimental.pallas import tpu as pltpu


# ----------------------------------------------------------------------------
# Peano space-filling curve (deterministic, power-of-3 grids)
# ----------------------------------------------------------------------------
def peano_curve(n):
    """Return list of (row, col) visiting every cell of an n x n grid along a
    Peano curve.  Requires n to be a power of 3."""
    k = int(round(np.log(n) / np.log(3)))
    assert 3 ** k == n, "peano_curve requires n to be a power of 3"

    def build(level):
        if level == 0:
            return [(0, 0)]
        m = 3 ** (level - 1)
        prev = build(level - 1)
        # macro 3x3 traversal: down col 0, up col 1, down col 2 (serpentine)
        macro = [(0, 0), (1, 0), (2, 0), (2, 1), (1, 1), (0, 1), (0, 2), (1, 2), (2, 2)]
        pts = []
        for (i, j) in macro:
            for (r, c) in prev:
                rr = (m - 1 - r) if (j % 2 == 1) else r   # flip rows when macro col odd
                cc = (m - 1 - c) if (i % 2 == 1) else c   # flip cols when macro row odd
                pts.append((i * m + rr, j * m + cc))
        return pts

    return build(k)


def sfc_flat_indices(grid_size):
    # TODO(synk): original embed_and_prune_sfc (embedding + pruning for non-3^k
    # grids) is not available; grid_size is chosen as a power of 3 so the
    # native Peano curve needs no pruning.
    curve = peano_curve(grid_size)
    return np.array([r * grid_size + c for r, c in curve], dtype=np.int32)


# ----------------------------------------------------------------------------
# Pallas kernel: single block  (M, K) @ (K, E) + bias  with M = B * n_final
# ----------------------------------------------------------------------------
def _proj_kernel(x_ref, w_ref, b_ref, o_ref):
    # x_ref: (M, K)   w_ref: (K, E)   b_ref: (1, E)   o_ref: (M, E)
    y = jnp.dot(x_ref[...], w_ref[...], preferred_element_type=jnp.float32)
    o_ref[...] = (y + b_ref[...]).astype(o_ref.dtype)        # bias broadcasts (1, E)


# ----------------------------------------------------------------------------
# Forward (glue + pallas_call)
# ----------------------------------------------------------------------------
def _patchify(x, p):
    """'b c (h p1) (w p2) -> b (h w) (p1 p2 c)'"""
    B, C, H, W = x.shape
    gh, gw = H // p, W // p
    x = x.reshape(B, C, gh, p, gw, p)
    x = x.transpose(0, 2, 4, 3, 5, 1)          # b, h, w, p1, p2, c
    return x.reshape(B, gh * gw, p * p * C)


def sfc_embedding_1d_forward(x, w_t, bias, *, sfc_indices_np, pre_patch_size,
                             group_patch_size):
    """x: (B, C, H, W) float32.  w_t: (input_dim, embed_dim).  bias: (1, embed_dim).

    sfc_indices_np is a *numpy* constant closed over at trace time so the SFC
    reorder lowers to a static permutation that XLA fuses with the patchify."""
    B = x.shape[0]
    x_pre = _patchify(x, pre_patch_size)                       # (B, n_pre, pre_dim)
    x_sfc = jnp.take(x_pre, jnp.asarray(sfc_indices_np), axis=1)  # static SFC reorder
    n_pre, pre_dim = x_sfc.shape[1], x_sfc.shape[2]
    n_final = n_pre // group_patch_size
    K = pre_dim * group_patch_size                             # input_dim
    E = w_t.shape[1]
    M = B * n_final
    # 'b (n g) d -> (b n) (g d)'  — fold batch into the matmul M dimension.
    x_grp = x_sfc.reshape(M, K)

    flops = 2 * M * K * E
    bytes_accessed = 4 * (M * K + K * E + E + M * E)

    out2d = pl.pallas_call(
        _proj_kernel,
        out_shape=jax.ShapeDtypeStruct((M, E), x.dtype),
        grid=(1,),                                             # single grid step
        in_specs=[
            pl.BlockSpec((M, K), lambda i: (0, 0)),
            pl.BlockSpec((K, E), lambda i: (0, 0)),
            pl.BlockSpec((1, E), lambda i: (0, 0)),
        ],
        out_specs=pl.BlockSpec((M, E), lambda i: (0, 0)),
        cost_estimate=pl.CostEstimate(
            flops=flops, transcendentals=0, bytes_accessed=bytes_accessed),
        compiler_params=pltpu.CompilerParams(
            dimension_semantics=("arbitrary",)),
    )(x_grp, w_t, bias)

    return out2d.reshape(B, n_final, E)


# ----------------------------------------------------------------------------
# Main
# ----------------------------------------------------------------------------
if __name__ == "__main__":
    # Module hyper-parameters (small, consistent with the PyTorch module).
    img_size = 18          # 18 / 2 = 9 = 3^2 grid  -> native Peano curve
    pre_patch_size = 2
    group_patch_size = 3
    in_channels = 4
    embed_dim = 128        # multiple of 128 lanes -> lane-dense output stores

    grid_size = img_size // pre_patch_size                       # 9
    n_pre_patches = grid_size * grid_size                        # 81
    n_final_patches = n_pre_patches // group_patch_size          # 27
    pre_patch_dim = in_channels * pre_patch_size * pre_patch_size  # 16
    input_dim = pre_patch_dim * group_patch_size                 # 48

    # Deterministic parameter init (mimics nn.Linear default: U(-1/sqrt(K), 1/sqrt(K))).
    key = jax.random.PRNGKey(0)
    kx, kw, kb = jax.random.split(key, 3)
    bound = 1.0 / np.sqrt(input_dim)
    # PyTorch stores weight as (embed_dim, input_dim); kernel consumes its transpose.
    w_pt = jax.random.uniform(kw, (embed_dim, input_dim), jnp.float32, -bound, bound)
    b_pt = jax.random.uniform(kb, (embed_dim,), jnp.float32, -bound, bound)
    w_t = jnp.asarray(w_pt.T)                  # (input_dim, embed_dim)
    bias = jnp.asarray(b_pt)[None, :]          # (1, embed_dim)

    # Compile-time constant SFC permutation (numpy, baked into the trace).
    sfc_indices_np = sfc_flat_indices(grid_size)                 # (81,) int32

    # Input: (B, C, H, W)
    B = 2
    x = jax.random.normal(kx, (B, in_channels, img_size, img_size), jnp.float32)

    fwd = jax.jit(functools.partial(
        sfc_embedding_1d_forward,
        sfc_indices_np=sfc_indices_np,
        pre_patch_size=pre_patch_size,
        group_patch_size=group_patch_size,
    ))
    y = fwd(x, w_t, bias)
    y = jax.block_until_ready(y)

    # Pure-JAX reference of the full forward pass for a correctness check.
    x_pre = _patchify(x, pre_patch_size)
    x_sfc = jnp.take(x_pre, jnp.asarray(sfc_indices_np), axis=1)
    x_grp = x_sfc.reshape(B, n_final_patches, input_dim)
    y_ref = jnp.einsum("bnk,ke->bne", x_grp, w_t,
                       precision=jax.lax.Precision.HIGHEST) + bias

    assert y.shape == (B, n_final_patches, embed_dim), y.shape
    np.testing.assert_allclose(np.asarray(y), np.asarray(y_ref), rtol=1e-5, atol=1e-5)
    print("KERNEL_OK")
</pallas_src>

<mosaic_0001>
module attributes {stable_mosaic.version = 11 : i64} {
  func.func @_proj_kernel(%arg0: i32, %arg1: memref<54x48xf32, #tpu.memory_space<vmem>>, %arg2: memref<48x128xf32, #tpu.memory_space<vmem>>, %arg3: memref<1x128xf32, #tpu.memory_space<vmem>>, %arg4: memref<54x128xf32, #tpu.memory_space<vmem>>) attributes {dimension_semantics = [#tpu.dimension_semantics<arbitrary>], iteration_bounds = array<i64: 1>, scalar_prefetch = 0 : i64, scratch_operands = 0 : i64, tpu.core_type = #tpu.core_type<tc>, window_params = [{pipeline_mode = #tpu.pipeline_mode<synchronous>, transform_indices = @transform_0, window_bounds = array<i64: 54, 48>}, {pipeline_mode = #tpu.pipeline_mode<synchronous>, transform_indices = @transform_1, window_bounds = array<i64: 48, 128>}, {pipeline_mode = #tpu.pipeline_mode<synchronous>, transform_indices = @transform_2, window_bounds = array<i64: 1, 128>}, {pipeline_mode = #tpu.pipeline_mode<synchronous>, transform_indices = @transform_3, window_bounds = array<i64: 54, 128>}]} {
    %c0 = arith.constant 0 : index
    %c0_0 = arith.constant 0 : index
    %0 = vector.load %arg1[%c0, %c0_0] : memref<54x48xf32, #tpu.memory_space<vmem>>, vector<54x48xf32>
    %c0_1 = arith.constant 0 : index
    %c0_2 = arith.constant 0 : index
    %1 = vector.load %arg2[%c0_1, %c0_2] : memref<48x128xf32, #tpu.memory_space<vmem>>, vector<48x128xf32>
    %cst = arith.constant dense<0.000000e+00> : vector<54x128xf32>
    %2 = tpu.matmul %0, %1, %cst {dimension_numbers = #tpu.dot_dimension_numbers<[1], [0], [0], [1], [0, 0, 1, 1], [], []>} : vector<54x48xf32>, vector<48x128xf32>, vector<54x128xf32> -> vector<54x128xf32>
    %c0_3 = arith.constant 0 : index
    %c0_4 = arith.constant 0 : index
    %3 = vector.load %arg3[%c0_3, %c0_4] : memref<1x128xf32, #tpu.memory_space<vmem>>, vector<1x128xf32>
    %4 = vector.broadcast %3 : vector<1x128xf32> to vector<54x128xf32>
    %5 = arith.addf %2, %4 : vector<54x128xf32>
    %c0_5 = arith.constant 0 : index
    %c0_6 = arith.constant 0 : index
    %6 = vector.load %arg4[%c0_5, %c0_6] : memref<54x128xf32, #tpu.memory_space<vmem>>, vector<54x128xf32>
    tpu.vector_store %arg4[%c0_5, %c0_6], %5 {strides = array<i32>} : memref<54x128xf32, #tpu.memory_space<vmem>>, vector<54x128xf32>,
    return
  }
  func.func @transform_0(%arg0: i32) -> (i32, i32) {
    %c0_i32 = arith.constant 0 : i32
    %c0_i32_0 = arith.constant 0 : i32
    %c0_i32_1 = arith.constant 0 : i32
    return %c0_i32, %c0_i32_0 : i32, i32
  }
  func.func @transform_1(%arg0: i32) -> (i32, i32) {
    %c0_i32 = arith.constant 0 : i32
    %c0_i32_0 = arith.constant 0 : i32
    %c0_i32_1 = arith.constant 0 : i32
    return %c0_i32, %c0_i32_0 : i32, i32
  }
  func.func @transform_2(%arg0: i32) -> (i32, i32) {
    %c0_i32 = arith.constant 0 : i32
    %c0_i32_0 = arith.constant 0 : i32
    %c0_i32_1 = arith.constant 0 : i32
    return %c0_i32, %c0_i32_0 : i32, i32
  }
  func.func @transform_3(%arg0: i32) -> (i32, i32) {
    %c0_i32 = arith.constant 0 : i32
    %c0_i32_0 = arith.constant 0 : i32
    %c0_i32_1 = arith.constant 0 : i32
    return %c0_i32, %c0_i32_0 : i32, i32
  }
}

</mosaic_0001>

<llo_original>
// kernel: sfc_embedding_1d_forward.1
$region0: #{sfc_embedding_1d_forward.1}
  #allocation0 [shape = 'u32[]', space=smem, size = 0x4, offset = 0x4, fixed_abs, tag = 'smem constant byte address 0x4 - core index']
  #allocation1 [shape = 'u32[72,128]{1,0:T(1,128)}', space=vmem, size = 0x9000, scoped, tag = 'internal scratch']
  %s0 = inlined_call_operand.vmem [shape: f32[54,48], index: 0, kind: input, shape index: {}]
  %s1 = inlined_call_operand.vmem [shape: f32[48,128], index: 1, kind: input, shape index: {}]
  %s2 = inlined_call_operand.vmem [shape: f32[1,128], index: 2, kind: input, shape index: {}]
  %s3 = inlined_call_operand.vmem [shape: f32[54,128], index: 3, kind: output, shape index: {}]
  %s4 = sld [smem:[#allocation0]]
  $region22: #{sfc_embedding_1d_forward.1} parent=0
    _
  %s6 = ssub.s32 1, %s4
  %s7 = scalar_select 0, %s6, %s4
  // Predicated region
  $region2: #{sfc_embedding_1d_forward.1} parent=0 // pred_check
    _
  $region3: #{sfc_embedding_1d_forward.1} parent=0 // pred_check_branch
    %9 = sbr.rel (0) target = $region5
  $region4: #{sfc_embedding_1d_forward.1} parent=0 // pred_region
    _
  $region5: #{sfc_embedding_1d_forward.1} parent=0 // pred_fallthru
    _
  // Predicated region
  $region6: #{sfc_embedding_1d_forward.1} parent=0 // pred_check
    _
  $region7: #{sfc_embedding_1d_forward.1} parent=0 // pred_check_branch
    %11 = sbr.rel (0) target = $region9
  $region8: #{sfc_embedding_1d_forward.1} parent=0 // pred_region
    _
  $region9: #{sfc_embedding_1d_forward.1} parent=0 // pred_fallthru
    _
  // Predicated region
  $region10: #{sfc_embedding_1d_forward.1} parent=0 // pred_check
    _
  $region11: #{sfc_embedding_1d_forward.1} parent=0 // pred_check_branch
    %13 = sbr.rel (0) target = $region13
  $region12: #{sfc_embedding_1d_forward.1} parent=0 // pred_region
    _
  $region13: #{sfc_embedding_1d_forward.1} parent=0 // pred_fallthru
    _
  %v14 = vld [vmem:[%s0] sm:$0xff]
  %v15 = vld [vmem:[%s0 + $0x8] sm:$0xff]
  %v16 = vld [vmem:[%s0 + $0x10] sm:$0xff]
  %v17 = vld [vmem:[%s0 + $0x18] sm:$0xff]
  %v18 = vld [vmem:[%s0 + $0x20] sm:$0xff]
  %v19 = vld [vmem:[%s0 + $0x28] sm:$0xff]
  %v20 = vld [vmem:[%s0 + $0x30] sm:$0x3f]
  %v21 = vld [vmem:[%s1] sm:$0xff]
  %v22 = vld [vmem:[%s1 + $0x8] sm:$0xff]
  %v23 = vld [vmem:[%s1 + $0x10] sm:$0xff]
  %v24 = vld [vmem:[%s1 + $0x18] sm:$0xff]
  %v25 = vld [vmem:[%s1 + $0x20] sm:$0xff]
  %v26 = vld [vmem:[%s1 + $0x28] sm:$0xff]
  %v27 = vld [vmem:[%s2] sm:$0x1]
  %v29 = vperm.slane %v27, 0
  %vm31 = vcmask 392192
  %v33 = vsel %vm31, %v14, 0
  %v36 = vsel %vm31, %v15, 0
  %v39 = vsel %vm31, %v16, 0
  %v42 = vsel %vm31, %v17, 0
  %v45 = vsel %vm31, %v18, 0
  %v48 = vsel %vm31, %v19, 0
  %v51 = vsel %vm31, %v20, 0
  %53 = vmatpush.msra.mxu0 0.0
  %54 = vmatpush.msra.mxu0 0.0
  %55 = vmatpush.msra.mxu0 0.0
  %56 = vmatpush.msra.mxu0 0.0
  %57 = vmatpush.msra.mxu0 0.0
  %58 = vmatpush.msra.mxu0 0.0
  %59 = vmatpush.msra.mxu0 0.0
  %60 = vmatpush.msra.mxu0 0.0
  %61 = vmatpush.msra.mxu0 0.0
  %62 = vmatpush.msra.mxu0 0.0
  %63 = vmatpush.msra.mxu0 %v26
  %64 = vmatpush.msra.mxu0 %v25
  %65 = vmatpush.msra.mxu0 %v24
  %66 = vmatpush.msra.mxu0 %v23
  %67 = vmatpush.msra.mxu0 %v22
  %68 = vmatpush.msra.mxu0 %v21
  %69 = vmatmul.f32.gmra.mxu0 %v33
  %v70 = vpop.f32.mrf.mxu0
  %v71 = vadd.f32 %v29, %v70
  %72 = vmatmul.f32.gmra.mxu0 %v36
  %v73 = vpop.f32.mrf.mxu0
  %v74 = vadd.f32 %v29, %v73
  %75 = vmatmul.f32.gmra.mxu0 %v39
  %v76 = vpop.f32.mrf.mxu0
  %v77 = vadd.f32 %v29, %v76
  %78 = vmatmul.f32.gmra.mxu0 %v42
  %v79 = vpop.f32.mrf.mxu0
  %v80 = vadd.f32 %v29, %v79
  %81 = vmatmul.f32.gmra.mxu0 %v45
  %v82 = vpop.f32.mrf.mxu0
  %v83 = vadd.f32 %v29, %v82
  %84 = vmatmul.f32.gmra.mxu0 %v48
  %v85 = vpop.f32.mrf.mxu0
  %v86 = vadd.f32 %v29, %v85
  %87 = vmatmul.f32.gmra.mxu0 %v51
  %v88 = vpop.f32.mrf.mxu0
  %v89 = vadd.f32 %v29, %v88
  %90 = vdwg.mxu0
  %91 = vst [vmem:[%s3] sm:$0xff] %v71
  %92 = vst [vmem:[%s3 + $0x8] sm:$0xff] %v74
  %93 = vst [vmem:[%s3 + $0x10] sm:$0xff] %v77
  %94 = vst [vmem:[%s3 + $0x18] sm:$0xff] %v80
  %95 = vst [vmem:[%s3 + $0x20] sm:$0xff] %v83
  %96 = vst [vmem:[%s3 + $0x28] sm:$0xff] %v86
  %97 = vst [vmem:[%s3 + $0x30] sm:$0x3f] %v89
  // Predicated region
  $region14: #{sfc_embedding_1d_forward.1} parent=0 // pred_check
    _
  $region15: #{sfc_embedding_1d_forward.1} parent=0 // pred_check_branch
    %99 = sbr.rel (0) target = $region17
  $region16: #{sfc_embedding_1d_forward.1} parent=0 // pred_region
    _
  $region17: #{sfc_embedding_1d_forward.1} parent=0 // pred_fallthru
    _
  // Predicated region
  $region18: #{sfc_embedding_1d_forward.1} parent=0 // pred_check
    _
  $region19: #{sfc_embedding_1d_forward.1} parent=0 // pred_check_branch
    %101 = sbr.rel (0) target = $region21
  $region20: #{sfc_embedding_1d_forward.1} parent=0 // pred_region
    _
  $region21: #{sfc_embedding_1d_forward.1} parent=0 // pred_fallthru
    _

</llo_original>
